<compile_context>
chip_gen: v7x
topology: tpu7x:2x2x1
jax: 0.10.0
libtpu: 0.0.40
codegen_flags: <defaults>
</compile_context>

<pallas_src>
import functools

import jax
import jax.numpy as jnp
from jax.experimental import pallas as pl
from jax.experimental.pallas import tpu as pltpu

DIV = 8                        # channel down-scaling factor vs. real Inception v3
NUM_CLASSES = 1000
FC_PAD = 1024                  # fc lane padding (1000 -> 1024) for an unmasked final store
# Fusing the 1x3/3x1 sibling convs of block E into one zero-embedded 3x3 conv trades
# ~3x extra MXU work for one fewer dispatch; only a win while dispatch-bound (small scale).
FUSE_E_SIBLINGS = DIV >= 4
_LANE = 128


def C(n):                      # scaled channel count
    return max(n // DIV, 1)


# ----------------------------------------------------------------------------
# Pallas kernels
# ----------------------------------------------------------------------------
def _conv_kernel(p_ref, w_ref, b_ref, o_ref, *, relu):
    # p_ref: (K, TM) bf16 im2col patches   w_ref: (Cout, K) bf16 (BN scale pre-folded)
    # b_ref: (Cout, 1) f32 folded BN bias  o_ref: (Cout, TM) bf16
    acc = jnp.dot(w_ref[...], p_ref[...], preferred_element_type=jnp.float32)
    out = acc + b_ref[...]
    if relu:
        out = jnp.maximum(out, 0.0)
    o_ref[...] = out.astype(o_ref.dtype)


def matmul_bias_act(patches, w, bias, relu):
    """(Cout, K) x (K, NM) -> (Cout, NM) bf16 with fused bias (+ReLU) epilogue.

    NM = N*Ho*Wo (batch folded into the lane axis).  Large-M (stem) convs are padded
    to a 128-multiple and tiled along M with a "parallel" grid axis; deep layers use
    a single exact block (tiny, dispatch-bound regime).
    """
    K, NM = patches.shape
    Cout = w.shape[0]
    if NM >= 1024:                                   # stem: lane-dense 128-multiple tiles
        tm = 512
        nm_pad = tm * pl.cdiv(NM, tm)
    elif NM >= 256:                                  # mid layers: single lane-dense block
        nm_pad = _LANE * pl.cdiv(NM, _LANE)
        tm = nm_pad
    else:                                            # deep layers: exact tiny block
        nm_pad, tm = NM, NM
    if nm_pad != NM:
        patches = jnp.pad(patches, ((0, 0), (0, nm_pad - NM)))
    out = pl.pallas_call(
        functools.partial(_conv_kernel, relu=relu),
        out_shape=jax.ShapeDtypeStruct((Cout, nm_pad), jnp.bfloat16),
        grid=(nm_pad // tm,),
        in_specs=[
            pl.BlockSpec((K, tm), lambda i: (0, i)),
            pl.BlockSpec((Cout, K), lambda i: (0, 0)),
            pl.BlockSpec((Cout, 1), lambda i: (0, 0)),
        ],
        out_specs=pl.BlockSpec((Cout, tm), lambda i: (0, i)),
        compiler_params=pltpu.CompilerParams(dimension_semantics=("parallel",)),
    )(patches, w, bias)
    if nm_pad != NM:
        out = out[:, :NM]
    return out


def _max_pool_kernel(x_ref, o_ref):
    xv = x_ref[...]                                  # (T, C, NM)
    taps = [xv[t] for t in range(xv.shape[0])]
    while len(taps) > 1:                             # tree reduction (short VPU dep chain)
        nxt = [jnp.maximum(taps[i], taps[i + 1]) for i in range(0, len(taps) - 1, 2)]
        if len(taps) % 2 == 1:
            nxt.append(taps[-1])
        taps = nxt
    o_ref[...] = taps[0]


def max_pool_3x3_s2(x):
    """max_pool2d(kernel=3, stride=2, pad=0) on (C, N, H, W) bf16.
    TODO(synk): move the window taps in-kernel (pl.ds strided reads) at full scale."""
    Cc, N, H, W = x.shape
    Ho = (H - 3) // 2 + 1
    Wo = (W - 3) // 2 + 1
    NM = N * Ho * Wo
    taps = [x[:, :, i:i + (Ho - 1) * 2 + 1:2, j:j + (Wo - 1) * 2 + 1:2].reshape(Cc, NM)
            for i in range(3) for j in range(3)]
    tap_arr = jnp.stack(taps, axis=0)                # (9, C, NM)
    out = pl.pallas_call(
        _max_pool_kernel,
        out_shape=jax.ShapeDtypeStruct((Cc, NM), x.dtype),
        grid=(1,),
        in_specs=[pl.BlockSpec((9, Cc, NM), lambda i: (0, 0, 0))],
        out_specs=pl.BlockSpec((Cc, NM), lambda i: (0, 0)),
    )(tap_arr)
    return out.reshape(Cc, N, Ho, Wo)


def _gap_fc_kernel(x_ref, w_ref, b_ref, o_ref):
    # x_ref: (N, C, M) bf16   w_ref: (C, FC_PAD) bf16   b_ref: (1, FC_PAD) f32
    pooled = jnp.mean(x_ref[...].astype(jnp.float32), axis=2)      # global average pool
    acc = jnp.dot(pooled.astype(jnp.bfloat16), w_ref[...],
                  preferred_element_type=jnp.float32)
    o_ref[...] = acc + b_ref[...]


def gap_fc(x, p):
    """Fused adaptive_avg_pool2d(1) + flatten + fc (eval-mode Dropout is identity)."""
    Cc, N, H, W = x.shape
    M = H * W
    xt = jnp.transpose(x.reshape(Cc, N, M), (1, 0, 2))              # (N, C, M)
    cls_pad = p["w"].shape[1]
    out = pl.pallas_call(
        _gap_fc_kernel,
        out_shape=jax.ShapeDtypeStruct((N, cls_pad), jnp.float32),
        grid=(1,),
        in_specs=[pl.BlockSpec((N, Cc, M), lambda i: (0, 0, 0)),
                  pl.BlockSpec((Cc, cls_pad), lambda i: (0, 0)),
                  pl.BlockSpec((1, cls_pad), lambda i: (0, 0))],
        out_specs=pl.BlockSpec((N, cls_pad), lambda i: (0, 0)),
    )(xt.astype(jnp.bfloat16), p["w"], p["bias"])
    return out[:, :NUM_CLASSES]


# ----------------------------------------------------------------------------
# Conv + (folded) BN + ReLU  — im2col glue in (C, N, H, W) layout, matmul in kernel
# ----------------------------------------------------------------------------
def conv_bn_relu(x, p, stride=(1, 1), pad=(0, 0), relu=True):
    # x: (Cin, N, H, W).   p["w"]: (Cout, KH, KW, Cin) bf16 (BN scale folded in),
    # p["bias"]: (Cout, 1) f32.   Returns (Cout, N, Ho, Wo) bf16.
    w = p["w"]
    Cout, KH, KW, Cin = w.shape
    _, N, H, W = x.shape
    sh, sw = stride
    ph, pw = pad
    Ho = (H + 2 * ph - KH) // sh + 1
    Wo = (W + 2 * pw - KW) // sw + 1
    NM = N * Ho * Wo
    if KH == 1 and KW == 1 and stride == (1, 1) and pad == (0, 0):
        patches = x.reshape(Cin, NM)                 # free reshape: no im2col glue at all
    else:
        # TODO(synk): at full scale move this tap loop in-kernel (pl.ds strided window
        # reads of the padded input) to remove the KH*KW HBM read amplification; at
        # these shapes the net is dispatch-bound and XLA fuses the pad/slice/concat.
        xp = jnp.pad(x, ((0, 0), (0, 0), (ph, ph), (pw, pw)))
        cols = []
        for i in range(KH):
            for j in range(KW):
                cols.append(xp[:, :, i:i + (Ho - 1) * sh + 1:sh,
                                   j:j + (Wo - 1) * sw + 1:sw].reshape(Cin, NM))
        patches = jnp.concatenate(cols, axis=0)      # (KH*KW*Cin, NM), tap-major
    patches = patches.astype(jnp.bfloat16)           # bf16 MXU operands, f32 accumulate
    wmat = w.reshape(Cout, KH * KW * Cin)
    out = matmul_bias_act(patches, wmat, p["bias"], relu)
    return out.reshape(Cout, N, Ho, Wo)


# ----------------------------------------------------------------------------
# Deterministic synthetic parameters (BatchNorm folded into scale/bias)
# ----------------------------------------------------------------------------
class ParamBank:
    def __init__(self, seed=0):
        self.key = jax.random.PRNGKey(seed)
        self.count = 0

    def _next(self):
        self.count += 1
        return jax.random.fold_in(self.key, self.count)

    def conv_raw(self, kh, kw, cin, cout):
        kw_, ks_, kb_ = jax.random.split(self._next(), 3)
        std = (2.0 / (kh * kw * cin)) ** 0.5
        return {
            "w": jax.random.normal(kw_, (kh, kw, cin, cout), jnp.float32) * std,
            "scale": 1.0 + 0.05 * jax.random.normal(ks_, (cout,), jnp.float32),
            "bias": 0.02 * jax.random.normal(kb_, (cout,), jnp.float32),
        }

    def linear(self, cin, cout, pad_to):
        kw_, kb_ = jax.random.split(self._next(), 2)
        std = (1.0 / cin) ** 0.5
        w = jax.random.normal(kw_, (cin, cout), jnp.float32) * std
        b = 0.02 * jax.random.normal(kb_, (1, cout), jnp.float32)
        return {
            "w": jnp.pad(w, ((0, 0), (0, pad_to - cout))).astype(jnp.bfloat16),
            "bias": jnp.pad(b, ((0, 0), (0, pad_to - cout))),
        }


def pack_conv(raw):
    """Raw (KH,KW,Cin,Cout) conv + folded-BN affine -> kernel-ready params.
    The BN scale is folded into the bf16 weights so the in-kernel epilogue is
    just bias + ReLU."""
    w = raw["w"] * raw["scale"][None, None, None, :]
    cout = w.shape[3]
    return {"w": jnp.transpose(w, (3, 0, 1, 2)).astype(jnp.bfloat16),
            "bias": raw["bias"].reshape(cout, 1)}


def concat_raw_convs(raws):
    """Fuse same-input convs (same KH,KW,Cin) by concatenating along Cout."""
    return {"w": jnp.concatenate([r["w"] for r in raws], axis=3),
            "scale": jnp.concatenate([r["scale"] for r in raws], axis=0),
            "bias": jnp.concatenate([r["bias"] for r in raws], axis=0)}


def embed_kernel(raw, KH, KW):
    """Zero-embed a (kh,kw) kernel into a centered (KH,KW) one (1x3/3x1 -> 3x3)."""
    w = raw["w"]
    kh, kw, cin, cout = w.shape
    oh, ow = (KH - kh) // 2, (KW - kw) // 2
    wz = jnp.zeros((KH, KW, cin, cout), jnp.float32).at[oh:oh + kh, ow:ow + kw].set(w)
    return {"w": wz, "scale": raw["scale"], "bias": raw["bias"]}


def fold_avgpool_3x3(raw_1x1):
    """avg_pool2d(3x3, stride 1, pad 1, count_include_pad=True — torchvision default,
    divisor always 9) followed by a 1x1 conv == one 3x3 pad-1 conv with all taps w/9."""
    w = raw_1x1["w"]                                 # (1, 1, Cin, Cout)
    return {"w": jnp.tile(w, (3, 3, 1, 1)) / 9.0,
            "scale": raw_1x1["scale"], "bias": raw_1x1["bias"]}


def fold_transform_input(raw):
    """Fold torchvision transform_input (per-input-channel affine) into the first conv.
    Valid only because Conv2d_1a_3x3 has no padding."""
    a = jnp.array([0.229 / 0.5, 0.224 / 0.5, 0.225 / 0.5], jnp.float32)
    c = jnp.array([(0.485 - 0.5) / 0.5, (0.456 - 0.5) / 0.5, (0.406 - 0.5) / 0.5],
                  jnp.float32)
    w = raw["w"]                                     # (kh, kw, 3, cout)
    const = jnp.einsum("hwio,i->o", w, c)
    return {"w": w * a[None, None, :, None], "scale": raw["scale"],
            "bias": raw["bias"] + raw["scale"] * const}


# ----------------------------------------------------------------------------
# Inception blocks
# ----------------------------------------------------------------------------
def make_inception_a(pb, cin, pool_f):
    entry = concat_raw_convs([pb.conv_raw(1, 1, cin, C(64)),      # b1x1
                              pb.conv_raw(1, 1, cin, C(48)),      # b5x5_1
                              pb.conv_raw(1, 1, cin, C(64))])     # b3dbl_1
    return dict(
        entry=pack_conv(entry),
        b5x5_2=pack_conv(pb.conv_raw(5, 5, C(48), C(64))),
        b3d_2=pack_conv(pb.conv_raw(3, 3, C(64), C(96))),
        b3d_3=pack_conv(pb.conv_raw(3, 3, C(96), C(96))),
        bpool=pack_conv(fold_avgpool_3x3(pb.conv_raw(1, 1, cin, pool_f))),
    )


def apply_inception_a(x, p):
    ent = conv_bn_relu(x, p["entry"])                # fused b1x1 / b5x5_1 / b3dbl_1
    c1, c2 = C(64), C(48)
    b1 = ent[:c1]
    b5 = conv_bn_relu(ent[c1:c1 + c2], p["b5x5_2"], pad=(2, 2))
    bd = conv_bn_relu(ent[c1 + c2:], p["b3d_2"], pad=(1, 1))
    bd = conv_bn_relu(bd, p["b3d_3"], pad=(1, 1))
    bp = conv_bn_relu(x, p["bpool"], pad=(1, 1))     # avg-pool folded into this conv
    return jnp.concatenate([b1, b5, bd, bp], axis=0)


def make_inception_b(pb, cin):
    return dict(
        b3x3=pack_conv(pb.conv_raw(3, 3, cin, C(384))),
        b3d_1=pack_conv(pb.conv_raw(1, 1, cin, C(64))),
        b3d_2=pack_conv(pb.conv_raw(3, 3, C(64), C(96))),
        b3d_3=pack_conv(pb.conv_raw(3, 3, C(96), C(96))),
    )


def apply_inception_b(x, p):
    b3 = conv_bn_relu(x, p["b3x3"], stride=(2, 2))
    bd = conv_bn_relu(x, p["b3d_1"])
    bd = conv_bn_relu(bd, p["b3d_2"], pad=(1, 1))
    bd = conv_bn_relu(bd, p["b3d_3"], stride=(2, 2))
    bp = max_pool_3x3_s2(x)
    return jnp.concatenate([b3, bd, bp], axis=0)


def make_inception_c(pb, cin, c7):
    entry = concat_raw_convs([pb.conv_raw(1, 1, cin, C(192)),     # b1x1
                              pb.conv_raw(1, 1, cin, c7),         # b7x7_1
                              pb.conv_raw(1, 1, cin, c7)])        # b7x7dbl_1
    return dict(
        entry=pack_conv(entry),
        b7_2=pack_conv(pb.conv_raw(1, 7, c7, c7)),
        b7_3=pack_conv(pb.conv_raw(7, 1, c7, C(192))),
        bd_2=pack_conv(pb.conv_raw(7, 1, c7, c7)),
        bd_3=pack_conv(pb.conv_raw(1, 7, c7, c7)),
        bd_4=pack_conv(pb.conv_raw(7, 1, c7, c7)),
        bd_5=pack_conv(pb.conv_raw(1, 7, c7, C(192))),
        bpool=pack_conv(fold_avgpool_3x3(pb.conv_raw(1, 1, cin, C(192)))),
    )


def apply_inception_c(x, p):
    ent = conv_bn_relu(x, p["entry"])                # fused b1x1 / b7_1 / bd_1
    c1 = C(192)
    c7 = p["b7_2"]["w"].shape[0]
    b1 = ent[:c1]
    b7 = conv_bn_relu(ent[c1:c1 + c7], p["b7_2"], pad=(0, 3))
    b7 = conv_bn_relu(b7, p["b7_3"], pad=(3, 0))
    bd = conv_bn_relu(ent[c1 + c7:], p["bd_2"], pad=(3, 0))
    bd = conv_bn_relu(bd, p["bd_3"], pad=(0, 3))
    bd = conv_bn_relu(bd, p["bd_4"], pad=(3, 0))
    bd = conv_bn_relu(bd, p["bd_5"], pad=(0, 3))
    bp = conv_bn_relu(x, p["bpool"], pad=(1, 1))     # avg-pool folded into this conv
    return jnp.concatenate([b1, b7, bd, bp], axis=0)


def make_inception_d(pb, cin):
    entry = concat_raw_convs([pb.conv_raw(1, 1, cin, C(192)),     # b3_1
                              pb.conv_raw(1, 1, cin, C(192))])    # b7_1
    return dict(
        entry=pack_conv(entry),
        b3_2=pack_conv(pb.conv_raw(3, 3, C(192), C(320))),
        b7_2=pack_conv(pb.conv_raw(1, 7, C(192), C(192))),
        b7_3=pack_conv(pb.conv_raw(7, 1, C(192), C(192))),
        b7_4=pack_conv(pb.conv_raw(3, 3, C(192), C(192))),
    )


def apply_inception_d(x, p):
    ent = conv_bn_relu(x, p["entry"])                # fused b3_1 / b7_1
    c1 = C(192)
    b3 = conv_bn_relu(ent[:c1], p["b3_2"], stride=(2, 2))
    b7 = conv_bn_relu(ent[c1:], p["b7_2"], pad=(0, 3))
    b7 = conv_bn_relu(b7, p["b7_3"], pad=(3, 0))
    b7 = conv_bn_relu(b7, p["b7_4"], stride=(2, 2))
    bp = max_pool_3x3_s2(x)
    return jnp.concatenate([b3, b7, bp], axis=0)


def make_inception_e(pb, cin):
    entry = concat_raw_convs([pb.conv_raw(1, 1, cin, C(320)),     # b1x1
                              pb.conv_raw(1, 1, cin, C(384)),     # b3_1
                              pb.conv_raw(1, 1, cin, C(448))])    # bd_1
    b3_2a = pb.conv_raw(1, 3, C(384), C(384))
    b3_2b = pb.conv_raw(3, 1, C(384), C(384))
    bd_3a = pb.conv_raw(1, 3, C(384), C(384))
    bd_3b = pb.conv_raw(3, 1, C(384), C(384))
    p = dict(
        entry=pack_conv(entry),
        bd_2=pack_conv(pb.conv_raw(3, 3, C(448), C(384))),
        bpool=pack_conv(fold_avgpool_3x3(pb.conv_raw(1, 1, cin, C(192)))),
    )
    if FUSE_E_SIBLINGS:
        # 1x3 / 3x1 siblings share the same input -> fuse as one 3x3 pad-(1,1) conv
        p["b3_2ab"] = pack_conv(concat_raw_convs([embed_kernel(b3_2a, 3, 3),
                                                  embed_kernel(b3_2b, 3, 3)]))
        p["bd_3ab"] = pack_conv(concat_raw_convs([embed_kernel(bd_3a, 3, 3),
                                                  embed_kernel(bd_3b, 3, 3)]))
    else:
        p["b3_2a"], p["b3_2b"] = pack_conv(b3_2a), pack_conv(b3_2b)
        p["bd_3a"], p["bd_3b"] = pack_conv(bd_3a), pack_conv(bd_3b)
    return p


def apply_inception_e(x, p):
    ent = conv_bn_relu(x, p["entry"])                # fused b1x1 / b3_1 / bd_1
    c1, c2 = C(320), C(384)
    b1 = ent[:c1]
    e3 = ent[c1:c1 + c2]
    bd = conv_bn_relu(ent[c1 + c2:], p["bd_2"], pad=(1, 1))
    if FUSE_E_SIBLINGS:
        b3 = conv_bn_relu(e3, p["b3_2ab"], pad=(1, 1))            # == cat(2a, 2b)
        bd = conv_bn_relu(bd, p["bd_3ab"], pad=(1, 1))            # == cat(3a, 3b)
    else:
        b3 = jnp.concatenate([conv_bn_relu(e3, p["b3_2a"], pad=(0, 1)),
                              conv_bn_relu(e3, p["b3_2b"], pad=(1, 0))], axis=0)
        bd = jnp.concatenate([conv_bn_relu(bd, p["bd_3a"], pad=(0, 1)),
                              conv_bn_relu(bd, p["bd_3b"], pad=(1, 0))], axis=0)
    bp = conv_bn_relu(x, p["bpool"], pad=(1, 1))     # avg-pool folded into this conv
    return jnp.concatenate([b1, b3, bd, bp], axis=0)


# ----------------------------------------------------------------------------
# Backbone (scaled Inception v3) + Net forward
# ----------------------------------------------------------------------------
def build_backbone(seed=0):
    pb = ParamBank(seed)
    P = {}
    P["Conv2d_1a_3x3"] = pack_conv(fold_transform_input(pb.conv_raw(3, 3, 3, C(32))))
    P["Conv2d_2a_3x3"] = pack_conv(pb.conv_raw(3, 3, C(32), C(32)))
    P["Conv2d_2b_3x3"] = pack_conv(pb.conv_raw(3, 3, C(32), C(64)))
    P["Conv2d_3b_1x1"] = pack_conv(pb.conv_raw(1, 1, C(64), C(80)))
    P["Conv2d_4a_3x3"] = pack_conv(pb.conv_raw(3, 3, C(80), C(192)))
    P["Mixed_5b"] = make_inception_a(pb, C(192), C(32))
    P["Mixed_5c"] = make_inception_a(pb, C(256), C(64))
    P["Mixed_5d"] = make_inception_a(pb, C(288), C(64))
    P["Mixed_6a"] = make_inception_b(pb, C(288))
    P["Mixed_6b"] = make_inception_c(pb, C(768), C(128))
    P["Mixed_6c"] = make_inception_c(pb, C(768), C(160))
    P["Mixed_6d"] = make_inception_c(pb, C(768), C(160))
    P["Mixed_6e"] = make_inception_c(pb, C(768), C(192))
    P["Mixed_7a"] = make_inception_d(pb, C(768))
    P["Mixed_7b"] = make_inception_e(pb, C(1280))
    P["Mixed_7c"] = make_inception_e(pb, C(2048))
    P["fc"] = pb.linear(C(2048), NUM_CLASSES, FC_PAD)
    return P


def net_forward(params, x_nchw):
    """Net.forward == BackBone(x): Inception v3, eval mode, transform_input=True.
    AuxLogits (train-only) omitted; eval-mode Dropout is identity."""
    # Activations live in a (C, N, H, W) layout: batch folds into the matmul lane axis.
    x = jnp.transpose(x_nchw.astype(jnp.float32), (1, 0, 2, 3))
    x = conv_bn_relu(x, params["Conv2d_1a_3x3"], stride=(2, 2))   # transform_input folded in
    x = conv_bn_relu(x, params["Conv2d_2a_3x3"])
    x = conv_bn_relu(x, params["Conv2d_2b_3x3"], pad=(1, 1))
    x = max_pool_3x3_s2(x)
    x = conv_bn_relu(x, params["Conv2d_3b_1x1"])
    x = conv_bn_relu(x, params["Conv2d_4a_3x3"])
    x = max_pool_3x3_s2(x)
    x = apply_inception_a(x, params["Mixed_5b"])
    x = apply_inception_a(x, params["Mixed_5c"])
    x = apply_inception_a(x, params["Mixed_5d"])
    x = apply_inception_b(x, params["Mixed_6a"])
    x = apply_inception_c(x, params["Mixed_6b"])
    x = apply_inception_c(x, params["Mixed_6c"])
    x = apply_inception_c(x, params["Mixed_6d"])
    x = apply_inception_c(x, params["Mixed_6e"])
    x = apply_inception_d(x, params["Mixed_7a"])
    x = apply_inception_e(x, params["Mixed_7b"])
    x = apply_inception_e(x, params["Mixed_7c"])
    # TODO(synk): at full scale relayout Mixed_6*/7* to tokens-by-channels for
    # lane-dense deep-layer stores (v6e/v7x) before the fused gap+fc tail.
    return gap_fc(x, params["fc"])


def _selfcheck_conv():
    """Tiny tolerance check of the Pallas conv vs. an XLA f32 reference (guards the
    im2col tap ordering and the scale/bias folding; bf16 operands -> ~1% drift)."""
    pb = ParamBank(seed=123)
    p = pack_conv(pb.conv_raw(3, 3, 5, 7))
    xk = jax.random.PRNGKey(42)
    x = jax.random.uniform(xk, (5, 2, 9, 9), jnp.float32)          # (C, N, H, W)
    got = conv_bn_relu(x, p, pad=(1, 1)).astype(jnp.float32)
    w_oihw = jnp.transpose(p["w"].astype(jnp.float32), (0, 3, 1, 2))
    ref = jax.lax.conv_general_dilated(
        jnp.transpose(x, (1, 0, 2, 3)), w_oihw, (1, 1), [(1, 1), (1, 1)],
        dimension_numbers=("NCHW", "OIHW", "NCHW"))
    ref = jnp.maximum(ref + p["bias"].reshape(1, -1, 1, 1), 0.0)
    ref = jnp.transpose(ref, (1, 0, 2, 3))
    assert bool(jnp.allclose(got, ref, atol=0.1, rtol=0.1)), "conv self-check failed"


if __name__ == "__main__":
    _selfcheck_conv()

    key = jax.random.PRNGKey(0)
    # Small NCHW image batch (75x75 is the minimal spatial size the stem supports).
    x = jax.random.uniform(key, (2, 3, 75, 75), dtype=jnp.float32)

    params = build_backbone(seed=0)
    fwd = jax.jit(net_forward)
    out = jax.block_until_ready(fwd(params, x))
    assert out.shape == (2, NUM_CLASSES)
    assert bool(jnp.all(jnp.isfinite(out)))
    print("KERNEL_OK")
</pallas_src>

<mosaic_0001>
module attributes {stable_mosaic.version = 11 : i64} {
  func.func @_conv_kernel(%arg0: i32, %arg1: memref<45x162xbf16, #tpu.memory_space<vmem>>, %arg2: memref<7x45xbf16, #tpu.memory_space<vmem>>, %arg3: memref<7x1xf32, #tpu.memory_space<vmem>>, %arg4: memref<7x162xbf16, #tpu.memory_space<vmem>>) attributes {dimension_semantics = [#tpu.dimension_semantics<parallel>], iteration_bounds = array<i64: 1>, scalar_prefetch = 0 : i64, scratch_operands = 0 : i64, tpu.core_type = #tpu.core_type<tc>, window_params = [{transform_indices = @transform_0, window_bounds = array<i64: 45, 162>}, {pipeline_mode = #tpu.pipeline_mode<synchronous>, transform_indices = @transform_1, window_bounds = array<i64: 7, 45>}, {pipeline_mode = #tpu.pipeline_mode<synchronous>, transform_indices = @transform_2, window_bounds = array<i64: 7, 1>}, {transform_indices = @transform_3, window_bounds = array<i64: 7, 162>}]} {
    %c0 = arith.constant 0 : index
    %c0_0 = arith.constant 0 : index
    %0 = vector.load %arg2[%c0, %c0_0] : memref<7x45xbf16, #tpu.memory_space<vmem>>, vector<7x45xbf16>
    %c0_1 = arith.constant 0 : index
    %c0_2 = arith.constant 0 : index
    %1 = vector.load %arg1[%c0_1, %c0_2] : memref<45x162xbf16, #tpu.memory_space<vmem>>, vector<45x162xbf16>
    %cst = arith.constant dense<0.000000e+00> : vector<7x162xf32>
    %2 = tpu.matmul %0, %1, %cst {dimension_numbers = #tpu.dot_dimension_numbers<[1], [0], [0], [1], [0, 0, 1, 1], [], []>} : vector<7x45xbf16>, vector<45x162xbf16>, vector<7x162xf32> -> vector<7x162xf32>
    %c0_3 = arith.constant 0 : index
    %c0_4 = arith.constant 0 : index
    %3 = vector.load %arg3[%c0_3, %c0_4] : memref<7x1xf32, #tpu.memory_space<vmem>>, vector<7x1xf32>
    %4 = vector.broadcast %3 : vector<7x1xf32> to vector<7x162xf32>
    %5 = arith.addf %2, %4 : vector<7x162xf32>
    %cst_5 = arith.constant 0.000000e+00 : f32
    %6 = vector.broadcast %cst_5 : f32 to vector<7x162xf32>
    %7 = arith.maximumf %5, %6 : vector<7x162xf32>
    %8 = arith.truncf %7 : vector<7x162xf32> to vector<7x162xbf16>
    %c0_6 = arith.constant 0 : index
    %c0_7 = arith.constant 0 : index
    %9 = vector.load %arg4[%c0_6, %c0_7] : memref<7x162xbf16, #tpu.memory_space<vmem>>, vector<7x162xbf16>
    tpu.vector_store %arg4[%c0_6, %c0_7], %8 {strides = array<i32>} : memref<7x162xbf16, #tpu.memory_space<vmem>>, vector<7x162xbf16>,
    return
  }
  func.func @transform_0(%arg0: i32) -> (i32, i32) {
    %c0_i32 = arith.constant 0 : i32
    %c0_i32_0 = arith.constant 0 : i32
    return %c0_i32, %arg0 : i32, i32
  }
  func.func @transform_1(%arg0: i32) -> (i32, i32) {
    %c0_i32 = arith.constant 0 : i32
    %c0_i32_0 = arith.constant 0 : i32
    %c0_i32_1 = arith.constant 0 : i32
    return %c0_i32, %c0_i32_0 : i32, i32
  }
  func.func @transform_2(%arg0: i32) -> (i32, i32) {
    %c0_i32 = arith.constant 0 : i32
    %c0_i32_0 = arith.constant 0 : i32
    %c0_i32_1 = arith.constant 0 : i32
    return %c0_i32, %c0_i32_0 : i32, i32
  }
  func.func @transform_3(%arg0: i32) -> (i32, i32) {
    %c0_i32 = arith.constant 0 : i32
    %c0_i32_0 = arith.constant 0 : i32
    return %c0_i32, %arg0 : i32, i32
  }
}

</mosaic_0001>

<llo_original>
// kernel: tpu_custom_call.1
$region0: #{tpu_custom_call.1}
  #allocation0 [shape = 'u32[]', space=smem, size = 0x4, offset = 0x4, fixed_abs, tag = 'smem constant byte address 0x4 - core index']
  #allocation1 [shape = 'u32[144,128]{1,0:T(1,128)}', space=vmem, size = 0x12000, scoped, tag = 'internal scratch']
  %s0 = inlined_call_operand.hbm [shape: bf16[45,162], index: 0, kind: input, shape index: {}]
  %s1 = inlined_call_operand.vmem [shape: bf16[7,45], index: 1, kind: input, shape index: {}]
  %s2 = inlined_call_operand.vmem [shape: f32[7,1], index: 2, kind: input, shape index: {}]
  %s3 = inlined_call_operand.hbm [shape: bf16[7,162], index: 3, kind: output, shape index: {}]
  %s4 = sld [smem:[#allocation0]]
  $region26: #{tpu_custom_call.1} parent=0
    _
  %s6 = ssub.s32 1, %s4
  %s7 = scalar_select 0, %s6, %s4
  $region1: #{tpu_custom_call.1} parent=0
    #allocation2 [shape = 'u8[24576]{0}', space=vmem, size = 0x6000, scoped, tag = 'input window, operand 0, single buffered']
    #allocation3 [shape = 's32[1]{0}', space=sflag, size = 0x4, scoped, tag = 'scoped memory for tpu_custom_call.1']
    #allocation4 [shape = 's32[1]{0}', space=sflag, size = 0x4, scoped, tag = 'scoped memory for tpu_custom_call.1']
    #allocation5 [shape = 'u8[4096]{0}', space=vmem, size = 0x1000, scoped, tag = 'output window, operand 0, single buffered']
    %8 = vsyncpa [#allocation3], 0
    %9 = vsyncpa [#allocation4], 0
    // Predicated region
    $region2: #{tpu_custom_call.1} parent=1 // pred_check
      _
    $region3: #{tpu_custom_call.1} parent=1 // pred_check_branch
      %11 = sbr.rel (0) target = $region5
    $region4: #{tpu_custom_call.1} parent=1 // pred_region
      %s13 = ssub.s32 768, 768
      %14 = vsyncadd [#allocation3], %s13
      %s15 = sshll.u32 [#allocation2], 4
      %s16 = int_to_ptr.vmem [resolvable:$true] %s15
      %21 = dma.hbm_to_vmem [thread:$0]  %s0, 768, %s16, [#allocation3], 128, 128, 8
    $region5: #{tpu_custom_call.1} parent=1 // pred_fallthru
      _
    // Predicated region
    $region6: #{tpu_custom_call.1} parent=1 // pred_check
      _
    $region7: #{tpu_custom_call.1} parent=1 // pred_check_branch
      %23 = sbr.rel (0) target = $region9
    $region8: #{tpu_custom_call.1} parent=1 // pred_region
      _
    $region9: #{tpu_custom_call.1} parent=1 // pred_fallthru
      _
    // Predicated region
    $region10: #{tpu_custom_call.1} parent=1 // pred_check
      _
    $region11: #{tpu_custom_call.1} parent=1 // pred_check_branch
      %25 = sbr.rel (0) target = $region13
    $region12: #{tpu_custom_call.1} parent=1 // pred_region
      _
    $region13: #{tpu_custom_call.1} parent=1 // pred_fallthru
      _
    // Predicated region
    $region14: #{tpu_custom_call.1} parent=1 // pred_check
      _
    $region15: #{tpu_custom_call.1} parent=1 // pred_check_branch
      %27 = sbr.rel (0) target = $region17
    $region16: #{tpu_custom_call.1} parent=1 // pred_region
      %28 = dma.done [#allocation3], 768
    $region17: #{tpu_custom_call.1} parent=1 // pred_fallthru
      _
    %v30 = vld [vmem:[%s1] sm:$0xf]
    %v31 = vld [vmem:[#allocation2] sm:$0xff]
    %v32 = vld [vmem:[#allocation2 + $0x8] sm:$0xff]
    %v33 = vld [vmem:[#allocation2 + $0x10] sm:$0xff]
    %v34 = vld [vmem:[#allocation2 + $0x18] sm:$0xff]
    %v35 = vld [vmem:[#allocation2 + $0x20] sm:$0xff]
    %v36 = vld [vmem:[#allocation2 + $0x28] sm:$0x77]
    %v37 = vld [vmem:[%s2] sm:$0x7f]
    %39 = vset.pattern.permute.xlu0 0
    %40 = vperm.xlu0 %39, %v37
    %v41 = vpop.permute.xlu0 %40
    %v49 = vunpack.c.l.b16 %v31
    %v50 = vunpack.c.h.b16 %v31
    %v51 = vunpack.c.l.b16 %v32
    %v52 = vunpack.c.h.b16 %v32
    %v53 = vunpack.c.l.b16 %v33
    %v54 = vunpack.c.h.b16 %v33
    %v55 = vunpack.c.l.b16 %v34
    %v56 = vunpack.c.h.b16 %v34
    %v57 = vunpack.c.l.b16 %v35
    %v58 = vunpack.c.h.b16 %v35
    %v59 = vunpack.c.l.b16 %v36
    %v60 = vunpack.c.h.b16 %v36
    %v61 = vpack.c.b16 %v51, %v49
    %v62 = vpack.c.b16 %v52, %v50
    %v63 = vpack.c.b16 %v55, %v53
    %v64 = vpack.c.b16 %v56, %v54
    %v65 = vpack.c.b16 %v59, %v57
    %v66 = vpack.c.b16 %v60, %v58
    %vm71 = vcmask 367616
    %v73 = vsel %vm71, %v30, 0
    %vm75 = vcmask 1045504
    %vm76 = vcmask 1046528
    %v77 = vsel %vm75, 4294967295, 65535
    %v78 = vsel %vm76, %v77, 0
    %v80 = vand.u32 %v65, %v78
    %v83 = vand.u32 %v66, %v78
    %85 = vmatprep.subr.bf16.mxu0 %v62
    %86 = vmatpush1.bf16.msra.mxu0 %v61
    %87 = vmatprep.subr.bf16.mxu0 %v64
    %88 = vmatpush1.bf16.msra.mxu0 %v63
    %89 = vmatprep.subr.bf16.mxu0 %v83
    %90 = vmatpush1.bf16.msra.mxu0 %v80
    %91 = vmatprep.subr.bf16.mxu0 0
    %92 = vmatpush1.bf16.msra.mxu0 0
    %93 = vmatprep.subr.bf16.mxu0 0
    %94 = vmatpush1.bf16.msra.mxu0 0
    %95 = vmatprep.subr.bf16.mxu0 0
    %96 = vmatpush1.bf16.msra.mxu0 0
    %97 = vmatprep.subr.bf16.mxu0 0
    %98 = vmatpush1.bf16.msra.mxu0 0
    %99 = vmatprep.subr.bf16.mxu0 0
    %100 = vmatpush1.bf16.msra.mxu0 0
    %101 = vmatprep.subr.bf16.mxu0 0
    %102 = vmatpush1.bf16.msra.mxu0 0
    %103 = vmatprep.subr.bf16.mxu0 0
    %104 = vmatpush1.bf16.msra.mxu0 0
    %105 = vmatprep.subr.bf16.mxu0 0
    %106 = vmatpush1.bf16.msra.mxu0 0
    %107 = vmatprep.subr.bf16.mxu0 0
    %108 = vmatpush1.bf16.msra.mxu0 0
    %109 = vmatprep.subr.bf16.mxu0 0
    %110 = vmatpush1.bf16.msra.mxu0 0
    %111 = vmatprep.subr.bf16.mxu0 0
    %112 = vmatpush1.bf16.msra.mxu0 0
    %113 = vmatprep.subr.bf16.mxu0 0
    %114 = vmatpush1.bf16.msra.mxu0 0
    %115 = vmatprep.subr.bf16.mxu0 0
    %116 = vmatpush1.bf16.msra.mxu0 0
    %117 = vmatprep.mubr.bf16.mxu0 0
    %118 = vmatmul.mubr.bf16.gmra.mrb[0].mxu0 %v73
    %v119 = vpop.f32.mrb[0].mxu0
    %v120 = vadd.f32 %v41, %v119
    %v121 = vpop.f32.mrb[0].mxu0
    %v122 = vadd.f32 %v41, %v121
    %v123 = vpop.f32.mrb[0].mxu0
    %v124 = vpop.f32.mrb[0].mxu0
    %125 = vdwg.mxu0
    %v126 = vmax.f32 %v120, 0.0
    %v127 = vmax.f32 %v122, 0.0
    %v128 = vpack.c.bf16 %v126, %v126
    %v129 = vpack.c.bf16 %v127, %v127
    %v132 = vunpack.c.l.b16 %v128
    %v133 = vunpack.c.l.b16 %v129
    %v134 = vpack.c.b16 %v133, %v132
    %vm136 = vcmask 1043456
    %vm137 = vsmask.f32 3328
    %vm138 = vmand %vm136, %vm137
    %vm139 = vcmask 277508
    %vm140 = vsmask.f32 7424
    %vm141 = vmand %vm139, %vm140
    %vm142 = vmor %vm141, %vm138
    %v143 = vld [vmem:[#allocation5] sm:$0xff]
    %v144 = vsel %vm142, %v134, %v143
    %145 = vst [vmem:[#allocation5] sm:$0xff] %v144
    // Predicated region
    $region18: #{tpu_custom_call.1} parent=1 // pred_check
      _
    $region19: #{tpu_custom_call.1} parent=1 // pred_check_branch
      %147 = sbr.rel (0) target = $region21
    $region20: #{tpu_custom_call.1} parent=1 // pred_region
      %s149 = ssub.s32 128, 128
      %150 = vsyncadd [#allocation4], %s149
      %s152 = sshll.u32 [#allocation5], 4
      %s153 = int_to_ptr.vmem [resolvable:$true] %s152
      %155 = dma.vmem_to_hbm [thread:$0]  %s153, 128, %s3, [#allocation4]
    $region21: #{tpu_custom_call.1} parent=1 // pred_fallthru
      _
    // Predicated region
    $region22: #{tpu_custom_call.1} parent=1 // pred_check
      _
    $region23: #{tpu_custom_call.1} parent=1 // pred_check_branch
      %157 = sbr.rel (0) target = $region25
    $region24: #{tpu_custom_call.1} parent=1 // pred_region
      %158 = dma.done [#allocation4], 128
    $region25: #{tpu_custom_call.1} parent=1 // pred_fallthru
      _
    %159 = vsyncpa [#allocation3], 1
    %160 = vsyncpa [#allocation4], 1

</llo_original>
